<compile_context>
chip_gen: v7x
topology: tpu7x:2x2x1
jax: 0.10.0
libtpu: 0.0.40
codegen_flags: <defaults>
</compile_context>

<pallas_src>
import math

import jax
import jax.numpy as jnp
from jax.experimental import pallas as pl
from jax.experimental.pallas import tpu as pltpu


def _gelu_exact(x):
    # nn.GELU default = exact erf-based GELU.  The erf is evaluated in f32 (EUP path,
    # known-good on v5e/v6e/v7x); the surrounding mul/add stay in x's dtype so the VPU
    # work runs at the bf16 rate on v6e/v7x when the activations are bf16.
    erf = jax.lax.erf(x.astype(jnp.float32) * (1.0 / math.sqrt(2.0)))
    return 0.5 * x * (1.0 + erf).astype(x.dtype)


def _make_head_kernel(num_layers: int):
    """Build kernel(cls_ref, w0, b0, w1, b1, ..., out_ref)."""

    def kernel(cls_ref, *refs):
        out_ref = refs[-1]
        wb = refs[:-1]
        compute_dtype = wb[0].dtype            # MXU operand dtype (bf16-native path)
        # bf16 params -> bias+GELU epilogue in bf16 (2x VPU/EUP rate on v6e/v7x);
        # f32 params keep an all-f32 epilogue (v5e, and matches an all-f32 torch module).
        act_dtype = compute_dtype if compute_dtype == jnp.bfloat16 else jnp.float32
        h = cls_ref[...].astype(compute_dtype)
        for i in range(num_layers):
            w = wb[2 * i][...]                 # (in, out) -- no f32 up-cast of operands
            b = wb[2 * i + 1][...]             # (1, out)
            acc = jnp.dot(h, w, preferred_element_type=jnp.float32)  # f32 MXU accumulation
            if i < num_layers - 1:
                a = acc.astype(act_dtype) + b.astype(act_dtype)
                # TODO(synk): training-mode Dropout not implemented (identity in eval mode).
                h = _gelu_exact(a).astype(compute_dtype)
                # TODO(synk): if this head ever becomes MXU-bound, split the layer's N dim
                # into slabs so bias+GELU of slab n overlaps the matmul of slab n+1.
            else:
                out_ref[...] = (acc + b.astype(jnp.float32)).astype(out_ref.dtype)

    return kernel


def _round_up(n: int, m: int) -> int:
    return ((n + m - 1) // m) * m


def _vmem_capacity_bytes() -> int:
    # Generation-aware VMEM ceiling: 128 MiB on v5e/v6e, 64 MiB/TC on v7x.
    try:
        return int(pltpu.get_tpu_info().vmem_capacity_bytes)
    except Exception:
        return 64 << 20  # conservative fallback (v7x per-TC)


def _pick_batch_tile(B: int, block_b: int) -> int:
    if B > block_b:
        return block_b
    if B >= 16:
        # Keep >= 2 grid steps so dimension_semantics=("parallel",) can shard the
        # batch across both TensorCores on v7x instead of idling one.
        return _round_up(pl.cdiv(B, 2), 8)
    return B  # tiny batch: single full-extent block (valid per the (8,128) rule)


def _vmem_limit_bytes(param_bytes, bt, d_in, c_pad, in_itemsize, out_itemsize,
                      widest_out, cap, param_buffer_count):
    """VMEM budget: resident params (single- or double-buffered), double-buffered
    activation/output tiles, f32 working set, plus headroom for Mosaic scratch."""
    acts = bt * d_in * in_itemsize
    outb = bt * c_pad * out_itemsize
    f32_work = 3 * bt * max(widest_out, c_pad) * 4
    est = param_buffer_count * param_bytes + 2 * (acts + outb) + f32_work + (8 << 20)
    return int(min(max(est, 32 << 20), int(cap * 0.85)))


def classification_head_forward(x, weights, biases, *, block_b=None, lane=128):
    """x: (B, S, D).  weights[i]: (in_i, out_i).  biases[i]: (out_i,)."""
    # CLS slice stays in the wrapper: a (bt, 1, D) window on (B, S, D) would put a
    # size-1 block on the sublane dim (violates the (8,128) block rule for general S).
    # TODO(synk): if the head shows up DMA-bound, fuse this slice into the producer or
    # pass full x with memory_space=pl.ANY and manually DMA the CLS rows.
    cls = x[:, 0, :]
    B, D = cls.shape
    num_layers = len(weights)
    C = weights[-1].shape[1]

    # Lane-dense output: pad num_classes up to a multiple of 128 with zero weight/bias
    # columns so the final store is an unmasked vst; padded logits are exactly 0 and are
    # sliced off below.  In production do this once at parameter-load time.
    c_pad = _round_up(C, lane)
    w_last, b_last = weights[-1], biases[-1]
    if c_pad != C:
        w_last = jnp.pad(w_last, ((0, 0), (0, c_pad - C)))
        b_last = jnp.pad(b_last, ((0, c_pad - C),))
    weights = list(weights[:-1]) + [w_last]
    biases = list(biases[:-1]) + [b_last]

    cap = _vmem_capacity_bytes()
    if block_b is None:
        # 128-MiB chips (v5e/v6e) take 512-row tiles (fewer grid steps, longer MXU M
        # runs); v7x's 64 MiB/TC keeps 256.
        block_b = 512 if cap >= (96 << 20) else 256
    bt = _pick_batch_tile(B, block_b)
    grid = (pl.cdiv(B, bt),)

    param_bytes = sum(w.size * w.dtype.itemsize for w in weights)
    param_bytes += sum(b.size * b.dtype.itemsize for b in biases)
    widest_out = max(w.shape[1] for w in weights)
    # TODO(synk): when resident params exceed ~70% of per-TC VMEM (e.g. D >~ 4500 for a
    # 2-layer bf16 head on v7x), stream the weights via a K/N-tiled "arbitrary" grid axis
    # with an f32 accumulator scratch instead of keeping them whole in VMEM.

    flops = 2 * B * sum(w.shape[0] * w.shape[1] for w in weights)
    transcendentals = B * sum(w.shape[1] for w in weights[:-1])
    bytes_accessed = (param_bytes + B * D * cls.dtype.itemsize
                      + B * c_pad * x.dtype.itemsize)
    cost = pl.CostEstimate(flops=flops, transcendentals=transcendentals,
                           bytes_accessed=bytes_accessed)

    inputs = [cls]
    param_shapes = []
    for w, b in zip(weights, biases):
        b2 = b.reshape(1, -1)
        inputs.append(w)
        inputs.append(b2)
        param_shapes.append((w.shape, b2.shape))

    kernel = _make_head_kernel(num_layers)

    def build(param_pipeline_mode, param_buffer_count):
        in_specs = [pl.BlockSpec((bt, D), lambda i: (i, 0))]
        for w_shape, b_shape in param_shapes:
            # Constant index_map -> weights/biases stay VMEM-resident across grid steps.
            if param_pipeline_mode is None:
                in_specs.append(pl.BlockSpec(w_shape, lambda i: (0, 0)))
                in_specs.append(pl.BlockSpec(b_shape, lambda i: (0, 0)))
            else:
                in_specs.append(pl.BlockSpec(w_shape, lambda i: (0, 0),
                                             pipeline_mode=param_pipeline_mode))
                in_specs.append(pl.BlockSpec(b_shape, lambda i: (0, 0),
                                             pipeline_mode=param_pipeline_mode))
        vmem_limit = _vmem_limit_bytes(param_bytes, bt, D, c_pad,
                                       cls.dtype.itemsize, x.dtype.itemsize,
                                       widest_out, cap, param_buffer_count)
        return pl.pallas_call(
            kernel,
            out_shape=jax.ShapeDtypeStruct((B, c_pad), x.dtype),
            grid=grid,
            in_specs=in_specs,
            out_specs=pl.BlockSpec((bt, c_pad), lambda i: (i, 0)),
            compiler_params=pltpu.CompilerParams(
                dimension_semantics=("parallel",),  # batch axis: shard across TCs on v7x
                vmem_limit_bytes=vmem_limit,
            ),
            cost_estimate=cost,
        )

    try:
        # Single-buffer the constant-index_map parameter blocks: halves their VMEM
        # footprint (double-buffering a block that never changes buys nothing).
        out_padded = build(pl.Buffered(1), 1)(*inputs)
    except Exception:
        # Fallback for JAX versions where pipeline_mode / Buffered(1) is not supported
        # on pallas_call BlockSpecs: default double buffering, budgeted accordingly.
        out_padded = build(None, 2)(*inputs)
    return out_padded[:, :C]


def _reference_forward(x, weights, biases):
    """Pure-JAX reference mirroring the kernel's dtype/cast points."""
    compute_dtype = weights[0].dtype
    act_dtype = compute_dtype if compute_dtype == jnp.bfloat16 else jnp.float32
    h = x[:, 0, :].astype(compute_dtype)
    n = len(weights)
    out = None
    for i, (w, b) in enumerate(zip(weights, biases)):
        acc = jnp.dot(h, w, preferred_element_type=jnp.float32)
        if i < n - 1:
            a = acc.astype(act_dtype) + b.astype(act_dtype)
            h = _gelu_exact(a).astype(compute_dtype)
        else:
            out = acc + b.astype(jnp.float32)
    return out.astype(x.dtype)


def _init_params(key, dim, num_classes, num_layers, dtype=jnp.float32):
    """Deterministic nn.Linear-style init: U(-1/sqrt(fan_in), 1/sqrt(fan_in))."""
    weights, biases = [], []
    for i in range(num_layers):
        fan_in = dim
        fan_out = num_classes if i == num_layers - 1 else dim
        key, kw, kb = jax.random.split(key, 3)
        bound = 1.0 / math.sqrt(fan_in)
        w = jax.random.uniform(kw, (fan_in, fan_out), jnp.float32, minval=-bound, maxval=bound)
        b = jax.random.uniform(kb, (fan_out,), jnp.float32, minval=-bound, maxval=bound)
        weights.append(w.astype(dtype))
        biases.append(b.astype(dtype))
    return weights, biases


if __name__ == "__main__":
    B, S, D = 2, 8, 32          # batch, seq, hidden
    NUM_CLASSES = 10
    NUM_LAYERS = 2              # one hidden Linear+GELU(+Dropout) then final Linear

    key = jax.random.PRNGKey(0)
    kx, kp = jax.random.split(key)
    x = jax.random.normal(kx, (B, S, D), jnp.float32)
    weights, biases = _init_params(kp, D, NUM_CLASSES, NUM_LAYERS)

    # f32 path (matches the PyTorch module numerics closely).
    out = jax.block_until_ready(classification_head_forward(x, weights, biases))
    ref = _reference_forward(x, weights, biases)
    assert out.shape == (B, NUM_CLASSES), out.shape
    assert jnp.allclose(out, ref, atol=1e-4, rtol=1e-4), "f32 mismatch vs reference"

    # bf16 path (MXU-native operands, f32 accumulation, bf16 epilogue) -- looser tolerance.
    x_bf = x.astype(jnp.bfloat16)
    w_bf = [w.astype(jnp.bfloat16) for w in weights]
    b_bf = [b.astype(jnp.bfloat16) for b in biases]
    out_bf = jax.block_until_ready(classification_head_forward(x_bf, w_bf, b_bf))
    ref_bf = _reference_forward(x_bf, w_bf, b_bf)
    assert out_bf.shape == (B, NUM_CLASSES), out_bf.shape
    assert jnp.allclose(out_bf.astype(jnp.float32), ref_bf.astype(jnp.float32),
                        atol=1e-1, rtol=1e-1), "bf16 mismatch vs reference"

    # NOTE: toy shapes (B=2, D=32, C=10) are pure launch overhead; benchmark with
    # realistic head sizes (B>=128, D>=768, bf16 params) to see the tiling/dtype wins.
    print("KERNEL_OK")
</pallas_src>

<mosaic_0001>
module attributes {stable_mosaic.version = 11 : i64} {
  func.func @kernel(%arg0: i32, %arg1: memref<2x32xf32, #tpu.memory_space<vmem>>, %arg2: memref<32x32xf32, #tpu.memory_space<vmem>>, %arg3: memref<1x32xf32, #tpu.memory_space<vmem>>, %arg4: memref<32x128xf32, #tpu.memory_space<vmem>>, %arg5: memref<1x128xf32, #tpu.memory_space<vmem>>, %arg6: memref<2x128xf32, #tpu.memory_space<vmem>>) attributes {dimension_semantics = [#tpu.dimension_semantics<parallel>], iteration_bounds = array<i64: 1>, scalar_prefetch = 0 : i64, scratch_operands = 0 : i64, tpu.core_type = #tpu.core_type<tc>, window_params = [{transform_indices = @transform_0, window_bounds = array<i64: 2, 32>}, {pipeline_mode = #tpu.pipeline_mode<synchronous>, transform_indices = @transform_1, window_bounds = array<i64: 32, 32>}, {pipeline_mode = #tpu.pipeline_mode<synchronous>, transform_indices = @transform_2, window_bounds = array<i64: 1, 32>}, {pipeline_mode = #tpu.pipeline_mode<synchronous>, transform_indices = @transform_3, window_bounds = array<i64: 32, 128>}, {pipeline_mode = #tpu.pipeline_mode<synchronous>, transform_indices = @transform_4, window_bounds = array<i64: 1, 128>}, {transform_indices = @transform_5, window_bounds = array<i64: 2, 128>}]} {
    %c0 = arith.constant 0 : index
    %c0_0 = arith.constant 0 : index
    %0 = vector.load %arg1[%c0, %c0_0] : memref<2x32xf32, #tpu.memory_space<vmem>>, vector<2x32xf32>
    %c0_1 = arith.constant 0 : index
    %c0_2 = arith.constant 0 : index
    %1 = vector.load %arg2[%c0_1, %c0_2] : memref<32x32xf32, #tpu.memory_space<vmem>>, vector<32x32xf32>
    %c0_3 = arith.constant 0 : index
    %c0_4 = arith.constant 0 : index
    %2 = vector.load %arg3[%c0_3, %c0_4] : memref<1x32xf32, #tpu.memory_space<vmem>>, vector<1x32xf32>
    %cst = arith.constant dense<0.000000e+00> : vector<2x32xf32>
    %3 = tpu.matmul %0, %1, %cst {dimension_numbers = #tpu.dot_dimension_numbers<[1], [0], [0], [1], [0, 0, 1, 1], [], []>} : vector<2x32xf32>, vector<32x32xf32>, vector<2x32xf32> -> vector<2x32xf32>
    %4 = vector.broadcast %2 : vector<1x32xf32> to vector<2x32xf32>
    %5 = arith.addf %3, %4 : vector<2x32xf32>
    %cst_5 = arith.constant 0.707106769 : f32
    %6 = vector.broadcast %cst_5 : f32 to vector<2x32xf32>
    %7 = arith.mulf %5, %6 : vector<2x32xf32>
    %8 = math.erf %7 : vector<2x32xf32>
    %cst_6 = arith.constant 5.000000e-01 : f32
    %9 = vector.broadcast %cst_6 : f32 to vector<2x32xf32>
    %10 = arith.mulf %9, %5 : vector<2x32xf32>
    %cst_7 = arith.constant 1.000000e+00 : f32
    %11 = vector.broadcast %cst_7 : f32 to vector<2x32xf32>
    %12 = arith.addf %11, %8 : vector<2x32xf32>
    %13 = arith.mulf %10, %12 : vector<2x32xf32>
    %c0_8 = arith.constant 0 : index
    %c0_9 = arith.constant 0 : index
    %14 = vector.load %arg4[%c0_8, %c0_9] : memref<32x128xf32, #tpu.memory_space<vmem>>, vector<32x128xf32>
    %c0_10 = arith.constant 0 : index
    %c0_11 = arith.constant 0 : index
    %15 = vector.load %arg5[%c0_10, %c0_11] : memref<1x128xf32, #tpu.memory_space<vmem>>, vector<1x128xf32>
    %cst_12 = arith.constant dense<0.000000e+00> : vector<2x128xf32>
    %16 = tpu.matmul %13, %14, %cst_12 {dimension_numbers = #tpu.dot_dimension_numbers<[1], [0], [0], [1], [0, 0, 1, 1], [], []>} : vector<2x32xf32>, vector<32x128xf32>, vector<2x128xf32> -> vector<2x128xf32>
    %17 = vector.broadcast %15 : vector<1x128xf32> to vector<2x128xf32>
    %18 = arith.addf %16, %17 : vector<2x128xf32>
    %c0_13 = arith.constant 0 : index
    %c0_14 = arith.constant 0 : index
    %19 = vector.load %arg6[%c0_13, %c0_14] : memref<2x128xf32, #tpu.memory_space<vmem>>, vector<2x128xf32>
    tpu.vector_store %arg6[%c0_13, %c0_14], %18 {strides = array<i32>} : memref<2x128xf32, #tpu.memory_space<vmem>>, vector<2x128xf32>,
    return
  }
  func.func @transform_0(%arg0: i32) -> (i32, i32) {
    %c0_i32 = arith.constant 0 : i32
    %c0_i32_0 = arith.constant 0 : i32
    return %arg0, %c0_i32 : i32, i32
  }
  func.func @transform_1(%arg0: i32) -> (i32, i32) {
    %c0_i32 = arith.constant 0 : i32
    %c0_i32_0 = arith.constant 0 : i32
    %c0_i32_1 = arith.constant 0 : i32
    return %c0_i32, %c0_i32_0 : i32, i32
  }
  func.func @transform_2(%arg0: i32) -> (i32, i32) {
    %c0_i32 = arith.constant 0 : i32
    %c0_i32_0 = arith.constant 0 : i32
    %c0_i32_1 = arith.constant 0 : i32
    return %c0_i32, %c0_i32_0 : i32, i32
  }
  func.func @transform_3(%arg0: i32) -> (i32, i32) {
    %c0_i32 = arith.constant 0 : i32
    %c0_i32_0 = arith.constant 0 : i32
    %c0_i32_1 = arith.constant 0 : i32
    return %c0_i32, %c0_i32_0 : i32, i32
  }
  func.func @transform_4(%arg0: i32) -> (i32, i32) {
    %c0_i32 = arith.constant 0 : i32
    %c0_i32_0 = arith.constant 0 : i32
    %c0_i32_1 = arith.constant 0 : i32
    return %c0_i32, %c0_i32_0 : i32, i32
  }
  func.func @transform_5(%arg0: i32) -> (i32, i32) {
    %c0_i32 = arith.constant 0 : i32
    %c0_i32_0 = arith.constant 0 : i32
    return %arg0, %c0_i32 : i32, i32
  }
}

module attributes {stable_mosaic.version = 11 : i64} {
  func.func @kernel(%arg0: i32, %arg1: memref<2x32xf32, #tpu.memory_space<vmem>>, %arg2: memref<32x32xf32, #tpu.memory_space<vmem>>, %arg3: memref<1x32xf32, #tpu.memory_space<vmem>>, %arg4: memref<32x128xf32, #tpu.memory_space<vmem>>, %arg5: memref<1x128xf32, #tpu.memory_space<vmem>>, %arg6: memref<2x128xf32, #tpu.memory_space<vmem>>) attributes {dimension_semantics = [#tpu.dimension_semantics<parallel>], iteration_bounds = array<i64: 1>, scalar_prefetch = 0 : i64, scratch_operands = 0 : i64, tpu.core_type = #tpu.core_type<tc>, window_params = [{transform_indices = @transform_0, window_bounds = array<i64: 2, 32>}, {pipeline_mode = #tpu.pipeline_mode<synchronous>, transform_indices = @transform_1, window_bounds = array<i64: 32, 32>}, {pipeline_mode = #tpu.pipeline_mode<synchronous>, transform_indices = @transform_2, window_bounds = array<i64: 1, 32>}, {pipeline_mode = #tpu.pipeline_mode<synchronous>, transform_indices = @transform_3, window_bounds = array<i64: 32, 128>}, {pipeline_mode = #tpu.pipeline_mode<synchronous>, transform_indices = @transform_4, window_bounds = array<i64: 1, 128>}, {transform_indices = @transform_5, window_bounds = array<i64: 2, 128>}]} {
    %c0 = arith.constant 0 : index
    %c0_0 = arith.constant 0 : index
    %0 = vector.load %arg1[%c0, %c0_0] : memref<2x32xf32, #tpu.memory_space<vmem>>, vector<2x32xf32>
    %c0_1 = arith.constant 0 : index
    %c0_2 = arith.constant 0 : index
    %1 = vector.load %arg2[%c0_1, %c0_2] : memref<32x32xf32, #tpu.memory_space<vmem>>, vector<32x32xf32>
    %c0_3 = arith.constant 0 : index
    %c0_4 = arith.constant 0 : index
    %2 = vector.load %arg3[%c0_3, %c0_4] : memref<1x32xf32, #tpu.memory_space<vmem>>, vector<1x32xf32>
    %cst = arith.constant dense<0.000000e+00> : vector<2x32xf32>
    %3 = tpu.matmul %0, %1, %cst {dimension_numbers = #tpu.dot_dimension_numbers<[1], [0], [0], [1], [0, 0, 1, 1], [], []>} : vector<2x32xf32>, vector<32x32xf32>, vector<2x32xf32> -> vector<2x32xf32>
    %4 = vector.broadcast %2 : vector<1x32xf32> to vector<2x32xf32>
    %5 = arith.addf %3, %4 : vector<2x32xf32>
    %cst_5 = arith.constant 0.707106769 : f32
    %6 = vector.broadcast %cst_5 : f32 to vector<2x32xf32>
    %7 = arith.mulf %5, %6 : vector<2x32xf32>
    %8 = math.erf %7 : vector<2x32xf32>
    %cst_6 = arith.constant 5.000000e-01 : f32
    %9 = vector.broadcast %cst_6 : f32 to vector<2x32xf32>
    %10 = arith.mulf %9, %5 : vector<2x32xf32>
    %cst_7 = arith.constant 1.000000e+00 : f32
    %11 = vector.broadcast %cst_7 : f32 to vector<2x32xf32>
    %12 = arith.addf %11, %8 : vector<2x32xf32>
    %13 = arith.mulf %10, %12 : vector<2x32xf32>
    %c0_8 = arith.constant 0 : index
    %c0_9 = arith.constant 0 : index
    %14 = vector.load %arg4[%c0_8, %c0_9] : memref<32x128xf32, #tpu.memory_space<vmem>>, vector<32x128xf32>
    %c0_10 = arith.constant 0 : index
    %c0_11 = arith.constant 0 : index
    %15 = vector.load %arg5[%c0_10, %c0_11] : memref<1x128xf32, #tpu.memory_space<vmem>>, vector<1x128xf32>
    %cst_12 = arith.constant dense<0.000000e+00> : vector<2x128xf32>
    %16 = tpu.matmul %13, %14, %cst_12 {dimension_numbers = #tpu.dot_dimension_numbers<[1], [0], [0], [1], [0, 0, 1, 1], [], []>} : vector<2x32xf32>, vector<32x128xf32>, vector<2x128xf32> -> vector<2x128xf32>
    %17 = vector.broadcast %15 : vector<1x128xf32> to vector<2x128xf32>
    %18 = arith.addf %16, %17 : vector<2x128xf32>
    %c0_13 = arith.constant 0 : index
    %c0_14 = arith.constant 0 : index
    %19 = vector.load %arg6[%c0_13, %c0_14] : memref<2x128xf32, #tpu.memory_space<vmem>>, vector<2x128xf32>
    tpu.vector_store %arg6[%c0_13, %c0_14], %18 {strides = array<i32>} : memref<2x128xf32, #tpu.memory_space<vmem>>, vector<2x128xf32>,
    return
  }
  func.func @transform_0(%arg0: i32) -> (i32, i32) {
    %c0_i32 = arith.constant 0 : i32
    %c0_i32_0 = arith.constant 0 : i32
    return %arg0, %c0_i32 : i32, i32
  }
  func.func @transform_1(%arg0: i32) -> (i32, i32) {
    %c0_i32 = arith.constant 0 : i32
    %c0_i32_0 = arith.constant 0 : i32
    %c0_i32_1 = arith.constant 0 : i32
    return %c0_i32, %c0_i32_0 : i32, i32
  }
  func.func @transform_2(%arg0: i32) -> (i32, i32) {
    %c0_i32 = arith.constant 0 : i32
    %c0_i32_0 = arith.constant 0 : i32
    %c0_i32_1 = arith.constant 0 : i32
    return %c0_i32, %c0_i32_0 : i32, i32
  }
  func.func @transform_3(%arg0: i32) -> (i32, i32) {
    %c0_i32 = arith.constant 0 : i32
    %c0_i32_0 = arith.constant 0 : i32
    %c0_i32_1 = arith.constant 0 : i32
    return %c0_i32, %c0_i32_0 : i32, i32
  }
  func.func @transform_4(%arg0: i32) -> (i32, i32) {
    %c0_i32 = arith.constant 0 : i32
    %c0_i32_0 = arith.constant 0 : i32
    %c0_i32_1 = arith.constant 0 : i32
    return %c0_i32, %c0_i32_0 : i32, i32
  }
  func.func @transform_5(%arg0: i32) -> (i32, i32) {
    %c0_i32 = arith.constant 0 : i32
    %c0_i32_0 = arith.constant 0 : i32
    return %arg0, %c0_i32 : i32, i32
  }
}

</mosaic_0001>

<llo_original>
// kernel: tpu_custom_call.1
$region0: #{tpu_custom_call.1}
  #allocation0 [shape = 'u32[]', space=smem, size = 0x4, offset = 0x4, fixed_abs, tag = 'smem constant byte address 0x4 - core index']
  #allocation1 [shape = 'u32[144,128]{1,0:T(1,128)}', space=vmem, size = 0x12000, scoped, tag = 'internal scratch']
  %s0 = inlined_call_operand.hbm [shape: f32[2,32], index: 0, kind: input, shape index: {}]
  %s1 = inlined_call_operand.hbm [shape: f32[32,32], index: 1, kind: input, shape index: {}]
  %s2 = inlined_call_operand.vmem [shape: f32[1,32], index: 2, kind: input, shape index: {}]
  %s3 = inlined_call_operand.hbm [shape: f32[32,128], index: 3, kind: input, shape index: {}]
  %s4 = inlined_call_operand.vmem [shape: f32[1,128], index: 4, kind: input, shape index: {}]
  %s5 = inlined_call_operand.hbm [shape: f32[2,128], index: 5, kind: output, shape index: {}]
  %s6 = sld [smem:[#allocation0]]
  $region42: #{tpu_custom_call.1} parent=0
    _
  %s8 = ssub.s32 1, %s6
  %s9 = scalar_select 0, %s8, %s6
  $region1: #{tpu_custom_call.1} parent=0
    #allocation2 [shape = 'u8[1024]{0}', space=vmem, size = 0x400, scoped, tag = 'input window, operand 0, single buffered']
    #allocation3 [shape = 's32[1]{0}', space=sflag, size = 0x4, scoped, tag = 'scoped memory for tpu_custom_call.1']
    #allocation4 [shape = 's32[1]{0}', space=sflag, size = 0x4, scoped, tag = 'scoped memory for tpu_custom_call.1']
    #allocation5 [shape = 'u8[16384]{0}', space=vmem, size = 0x4000, scoped, tag = 'input window, operand 1, single buffered']
    #allocation6 [shape = 's32[1]{0}', space=sflag, size = 0x4, scoped, tag = 'scoped memory for tpu_custom_call.1']
    #allocation7 [shape = 'u8[16384]{0}', space=vmem, size = 0x4000, scoped, tag = 'input window, operand 3, single buffered']
    #allocation8 [shape = 'u8[1024]{0}', space=vmem, size = 0x400, scoped, tag = 'output window, operand 0, single buffered']
    %10 = vsyncpa [#allocation3], 0
    %11 = vsyncpa [#allocation6], 0
    %12 = vsyncpa [#allocation4], 0
    // Predicated region
    $region2: #{tpu_custom_call.1} parent=1 // pred_check
      _
    $region3: #{tpu_custom_call.1} parent=1 // pred_check_branch
      %14 = sbr.rel (0) target = $region5
    $region4: #{tpu_custom_call.1} parent=1 // pred_region
      %s16 = ssub.s32 32, 32
      %17 = vsyncadd [#allocation3], %s16
      %s19 = sshll.u32 [#allocation2], 4
      %s20 = int_to_ptr.vmem [resolvable:$true] %s19
      %22 = dma.hbm_to_vmem [thread:$0]  %s0, 32, %s20, [#allocation3]
    $region5: #{tpu_custom_call.1} parent=1 // pred_fallthru
      _
    // Predicated region
    $region6: #{tpu_custom_call.1} parent=1 // pred_check
      _
    $region7: #{tpu_custom_call.1} parent=1 // pred_check_branch
      %24 = sbr.rel (0) target = $region9
    $region8: #{tpu_custom_call.1} parent=1 // pred_region
      %s26 = ssub.s32 512, 512
      %27 = vsyncadd [#allocation6], %s26
      %s28 = sshll.u32 [#allocation5], 4
      %s29 = int_to_ptr.vmem [resolvable:$true] %s28
      %34 = dma.hbm_to_vmem [thread:$0]  %s1, 512, %s29, [#allocation6], 128, 128, 8
    $region9: #{tpu_custom_call.1} parent=1 // pred_fallthru
      _
    // Predicated region
    $region10: #{tpu_custom_call.1} parent=1 // pred_check
      _
    $region11: #{tpu_custom_call.1} parent=1 // pred_check_branch
      %36 = sbr.rel (0) target = $region13
    $region12: #{tpu_custom_call.1} parent=1 // pred_region
      _
    $region13: #{tpu_custom_call.1} parent=1 // pred_fallthru
      _
    // Predicated region
    $region14: #{tpu_custom_call.1} parent=1 // pred_check
      _
    $region15: #{tpu_custom_call.1} parent=1 // pred_check_branch
      %38 = sbr.rel (0) target = $region17
    $region16: #{tpu_custom_call.1} parent=1 // pred_region
      %s40 = ssub.s32 512, 512
      %41 = vsyncadd [#allocation6], %s40
      %s42 = sshll.u32 [#allocation7], 4
      %s43 = int_to_ptr.vmem [resolvable:$true] %s42
      %48 = dma.hbm_to_vmem [thread:$0]  %s3, 512, %s43, [#allocation6], 128, 128, 8
    $region17: #{tpu_custom_call.1} parent=1 // pred_fallthru
      _
    // Predicated region
    $region18: #{tpu_custom_call.1} parent=1 // pred_check
      _
    $region19: #{tpu_custom_call.1} parent=1 // pred_check_branch
      %50 = sbr.rel (0) target = $region21
    $region20: #{tpu_custom_call.1} parent=1 // pred_region
      _
    $region21: #{tpu_custom_call.1} parent=1 // pred_fallthru
      _
    // Predicated region
    $region22: #{tpu_custom_call.1} parent=1 // pred_check
      _
    $region23: #{tpu_custom_call.1} parent=1 // pred_check_branch
      %52 = sbr.rel (0) target = $region25
    $region24: #{tpu_custom_call.1} parent=1 // pred_region
      %53 = dma.done [#allocation3], 32
    $region25: #{tpu_custom_call.1} parent=1 // pred_fallthru
      _
    // Predicated region
    $region26: #{tpu_custom_call.1} parent=1 // pred_check
      _
    $region27: #{tpu_custom_call.1} parent=1 // pred_check_branch
      %55 = sbr.rel (0) target = $region29
    $region28: #{tpu_custom_call.1} parent=1 // pred_region
      %56 = dma.done [#allocation6], 512
    $region29: #{tpu_custom_call.1} parent=1 // pred_fallthru
      _
    // Predicated region
    $region30: #{tpu_custom_call.1} parent=1 // pred_check
      _
    $region31: #{tpu_custom_call.1} parent=1 // pred_check_branch
      %58 = sbr.rel (0) target = $region33
    $region32: #{tpu_custom_call.1} parent=1 // pred_region
      %59 = dma.done [#allocation6], 512
    $region33: #{tpu_custom_call.1} parent=1 // pred_fallthru
      _
    %v60 = vld [vmem:[#allocation2] sm:$0x3]
    %v61 = vld [vmem:[#allocation5] sm:$0xff]
    %v62 = vld [vmem:[#allocation5 + $0x8] sm:$0xff]
    %v63 = vld [vmem:[#allocation5 + $0x10] sm:$0xff]
    %v64 = vld [vmem:[#allocation5 + $0x18] sm:$0xff]
    %v65 = vld [vmem:[%s2] sm:$0x1]
    %v67 = vlaneseq
    %v68 = vshrl.u32 %v67, 7
    %v69 = vsub.s32 0, %v68
    %v70 = vrot.slane %v65, %v69
    %vm72 = vcmask 261120
    %v74 = vsel %vm72, %v60, 0
    %76 = vmatprep.subr.mxu0 0.0
    %77 = vmatpush1.msra.mxu0 %v61
    %78 = vmatprep.subr.mxu0 0.0
    %79 = vmatpush1.msra.mxu0 %v62
    %80 = vmatprep.subr.mxu0 0.0
    %81 = vmatpush1.msra.mxu0 %v63
    %82 = vmatprep.subr.mxu0 0.0
    %83 = vmatpush1.msra.mxu0 %v64
    %84 = vmatprep.subr.mxu0 0.0
    %85 = vmatpush1.msra.mxu0 0.0
    %86 = vmatprep.subr.mxu0 0.0
    %87 = vmatpush1.msra.mxu0 0.0
    %88 = vmatprep.subr.mxu0 0.0
    %89 = vmatpush1.msra.mxu0 0.0
    %90 = vmatprep.subr.mxu0 0.0
    %91 = vmatpush1.msra.mxu0 0.0
    %92 = vmatprep.subr.mxu0 0.0
    %93 = vmatpush1.msra.mxu0 0.0
    %94 = vmatprep.subr.mxu0 0.0
    %95 = vmatpush1.msra.mxu0 0.0
    %96 = vmatprep.subr.mxu0 0.0
    %97 = vmatpush1.msra.mxu0 0.0
    %98 = vmatprep.subr.mxu0 0.0
    %99 = vmatpush1.msra.mxu0 0.0
    %100 = vmatprep.subr.mxu0 0.0
    %101 = vmatpush1.msra.mxu0 0.0
    %102 = vmatprep.subr.mxu0 0.0
    %103 = vmatpush1.msra.mxu0 0.0
    %104 = vmatprep.subr.mxu0 0.0
    %105 = vmatpush1.msra.mxu0 0.0
    %106 = vmatprep.subr.mxu0 0.0
    %107 = vmatpush1.msra.mxu0 0.0
    %108 = vmatprep.subr.mxu0 0.0
    %109 = vmatpush1.msra.mxu0 0.0
    %110 = vmatprep.subr.mxu0 0.0
    %111 = vmatpush1.msra.mxu0 0.0
    %112 = vmatprep.subr.mxu0 0.0
    %113 = vmatpush1.msra.mxu0 0.0
    %114 = vmatprep.subr.mxu0 0.0
    %115 = vmatpush1.msra.mxu0 0.0
    %116 = vmatprep.subr.mxu0 0.0
    %117 = vmatpush1.msra.mxu0 0.0
    %118 = vmatprep.subr.mxu0 0.0
    %119 = vmatpush1.msra.mxu0 0.0
    %120 = vmatprep.subr.mxu0 0.0
    %121 = vmatpush1.msra.mxu0 0.0
    %122 = vmatprep.subr.mxu0 0.0
    %123 = vmatpush1.msra.mxu0 0.0
    %124 = vmatprep.subr.mxu0 0.0
    %125 = vmatpush1.msra.mxu0 0.0
    %126 = vmatprep.subr.mxu0 0.0
    %127 = vmatpush1.msra.mxu0 0.0
    %128 = vmatprep.subr.mxu0 0.0
    %129 = vmatpush1.msra.mxu0 0.0
    %130 = vmatprep.subr.mxu0 0.0
    %131 = vmatpush1.msra.mxu0 0.0
    %132 = vmatprep.subr.mxu0 0.0
    %133 = vmatpush1.msra.mxu0 0.0
    %134 = vmatprep.subr.mxu0 0.0
    %135 = vmatpush1.msra.mxu0 0.0
    %136 = vmatprep.subr.mxu0 0.0
    %137 = vmatpush1.msra.mxu0 0.0
    %138 = vmatprep.subr.mxu0 0.0
    %139 = vmatpush1.msra.mxu0 0.0
    %140 = vmatprep.mubr.f32.mxu0 0.0
    %141 = vmatmul.mubr.f32.gmra.mrb[0].mxu0 %v74
    %v142 = vpop.f32.mrb[0].mxu0
    %v143 = vadd.f32 %v70, %v142
    %v144 = vpop.f32.mrb[0].mxu0
    %145 = vdwg.mxu0
    %v146 = vmul.f32 %v143, 0.70710677
    %v147 = verf.f32.pop %v146
    %v148 = vmul.f32 %v143, 0.5
    %v149 = vadd.f32 %v147, 1.0
    %v150 = vmul.f32 %v148, %v149
    %v151 = vld [vmem:[#allocation7] sm:$0xff]
    %v152 = vld [vmem:[#allocation7 + $0x8] sm:$0xff]
    %v153 = vld [vmem:[#allocation7 + $0x10] sm:$0xff]
    %v154 = vld [vmem:[#allocation7 + $0x18] sm:$0xff]
    %v155 = vld [vmem:[%s4] sm:$0x1]
    %v157 = vlaneseq
    %v158 = vshrl.u32 %v157, 7
    %v159 = vsub.s32 0, %v158
    %v160 = vrot.slane %v155, %v159
    %v163 = vsel %vm72, %v150, 0
    %165 = vmatprep.subr.mxu0 0.0
    %166 = vmatpush1.msra.mxu0 %v151
    %167 = vmatprep.subr.mxu0 0.0
    %168 = vmatpush1.msra.mxu0 %v152
    %169 = vmatprep.subr.mxu0 0.0
    %170 = vmatpush1.msra.mxu0 %v153
    %171 = vmatprep.subr.mxu0 0.0
    %172 = vmatpush1.msra.mxu0 %v154
    %173 = vmatprep.subr.mxu0 0.0
    %174 = vmatpush1.msra.mxu0 0.0
    %175 = vmatprep.subr.mxu0 0.0
    %176 = vmatpush1.msra.mxu0 0.0
    %177 = vmatprep.subr.mxu0 0.0
    %178 = vmatpush1.msra.mxu0 0.0
    %179 = vmatprep.subr.mxu0 0.0
    %180 = vmatpush1.msra.mxu0 0.0
    %181 = vmatprep.subr.mxu0 0.0
    %182 = vmatpush1.msra.mxu0 0.0
    %183 = vmatprep.subr.mxu0 0.0
    %184 = vmatpush1.msra.mxu0 0.0
    %185 = vmatprep.subr.mxu0 0.0
    %186 = vmatpush1.msra.mxu0 0.0
    %187 = vmatprep.subr.mxu0 0.0
    %188 = vmatpush1.msra.mxu0 0.0
    %189 = vmatprep.subr.mxu0 0.0
    %190 = vmatpush1.msra.mxu0 0.0
    %191 = vmatprep.subr.mxu0 0.0
    %192 = vmatpush1.msra.mxu0 0.0
    %193 = vmatprep.subr.mxu0 0.0
    %194 = vmatpush1.msra.mxu0 0.0
    %195 = vmatprep.subr.mxu0 0.0
    %196 = vmatpush1.msra.mxu0 0.0
    %197 = vmatprep.subr.mxu0 0.0
    %198 = vmatpush1.msra.mxu0 0.0
    %199 = vmatprep.subr.mxu0 0.0
    %200 = vmatpush1.msra.mxu0 0.0
    %201 = vmatprep.subr.mxu0 0.0
    %202 = vmatpush1.msra.mxu0 0.0
    %203 = vmatprep.subr.mxu0 0.0
    %204 = vmatpush1.msra.mxu0 0.0
    %205 = vmatprep.subr.mxu0 0.0
    %206 = vmatpush1.msra.mxu0 0.0
    %207 = vmatprep.subr.mxu0 0.0
    %208 = vmatpush1.msra.mxu0 0.0
    %209 = vmatprep.subr.mxu0 0.0
    %210 = vmatpush1.msra.mxu0 0.0
    %211 = vmatprep.subr.mxu0 0.0
    %212 = vmatpush1.msra.mxu0 0.0
    %213 = vmatprep.subr.mxu0 0.0
    %214 = vmatpush1.msra.mxu0 0.0
    %215 = vmatprep.subr.mxu0 0.0
    %216 = vmatpush1.msra.mxu0 0.0
    %217 = vmatprep.subr.mxu0 0.0
    %218 = vmatpush1.msra.mxu0 0.0
    %219 = vmatprep.subr.mxu0 0.0
    %220 = vmatpush1.msra.mxu0 0.0
    %221 = vmatprep.subr.mxu0 0.0
    %222 = vmatpush1.msra.mxu0 0.0
    %223 = vmatprep.subr.mxu0 0.0
    %224 = vmatpush1.msra.mxu0 0.0
    %225 = vmatprep.subr.mxu0 0.0
    %226 = vmatpush1.msra.mxu0 0.0
    %227 = vmatprep.subr.mxu0 0.0
    %228 = vmatpush1.msra.mxu0 0.0
    %229 = vmatprep.mubr.f32.mxu0 0.0
    %230 = vmatmul.mubr.f32.gmra.mrb[0].mxu0 %v163
    %v231 = vpop.f32.mrb[0].mxu0
    %v232 = vadd.f32 %v160, %v231
    %v233 = vpop.f32.mrb[0].mxu0
    %234 = vdwg.mxu0
    %235 = vst [vmem:[#allocation8] sm:$0x3] %v232
    // Predicated region
    $region34: #{tpu_custom_call.1} parent=1 // pred_check
      _
    $region35: #{tpu_custom_call.1} parent=1 // pred_check_branch
      %237 = sbr.rel (0) target = $region37
    $region36: #{tpu_custom_call.1} parent=1 // pred_region
      %s239 = ssub.s32 32, 32
      %240 = vsyncadd [#allocation4], %s239
      %s242 = sshll.u32 [#allocation8], 4
      %s243 = int_to_ptr.vmem [resolvable:$true] %s242
      %245 = dma.vmem_to_hbm [thread:$0]  %s243, 32, %s5, [#allocation4]
    $region37: #{tpu_custom_call.1} parent=1 // pred_fallthru
      _
    // Predicated region
    $region38: #{tpu_custom_call.1} parent=1 // pred_check
      _
    $region39: #{tpu_custom_call.1} parent=1 // pred_check_branch
      %247 = sbr.rel (0) target = $region41
    $region40: #{tpu_custom_call.1} parent=1 // pred_region
      %248 = dma.done [#allocation4], 32
    $region41: #{tpu_custom_call.1} parent=1 // pred_fallthru
      _
    %249 = vsyncpa [#allocation3], 1
    %250 = vsyncpa [#allocation6], 1
    %251 = vsyncpa [#allocation4], 1

// kernel: tpu_custom_call.1
$region0: #{tpu_custom_call.1}
  #allocation0 [shape = 'u32[]', space=smem, size = 0x4, offset = 0x4, fixed_abs, tag = 'smem constant byte address 0x4 - core index']
  #allocation1 [shape = 'u32[144,128]{1,0:T(1,128)}', space=vmem, size = 0x12000, scoped, tag = 'internal scratch']
  %s0 = inlined_call_operand.hbm [shape: f32[2,32], index: 0, kind: input, shape index: {}]
  %s1 = inlined_call_operand.hbm [shape: f32[32,32], index: 1, kind: input, shape index: {}]
  %s2 = inlined_call_operand.vmem [shape: f32[1,32], index: 2, kind: input, shape index: {}]
  %s3 = inlined_call_operand.hbm [shape: f32[32,128], index: 3, kind: input, shape index: {}]
  %s4 = inlined_call_operand.vmem [shape: f32[1,128], index: 4, kind: input, shape index: {}]
  %s5 = inlined_call_operand.hbm [shape: f32[2,128], index: 5, kind: output, shape index: {}]
  %s6 = sld [smem:[#allocation0]]
  $region42: #{tpu_custom_call.1} parent=0
    _
  %s8 = ssub.s32 1, %s6
  %s9 = scalar_select 0, %s8, %s6
  $region1: #{tpu_custom_call.1} parent=0
    #allocation2 [shape = 'u8[1024]{0}', space=vmem, size = 0x400, scoped, tag = 'input window, operand 0, single buffered']
    #allocation3 [shape = 's32[1]{0}', space=sflag, size = 0x4, scoped, tag = 'scoped memory for tpu_custom_call.1']
    #allocation4 [shape = 's32[1]{0}', space=sflag, size = 0x4, scoped, tag = 'scoped memory for tpu_custom_call.1']
    #allocation5 [shape = 'u8[16384]{0}', space=vmem, size = 0x4000, scoped, tag = 'input window, operand 1, single buffered']
    #allocation6 [shape = 's32[1]{0}', space=sflag, size = 0x4, scoped, tag = 'scoped memory for tpu_custom_call.1']
    #allocation7 [shape = 'u8[16384]{0}', space=vmem, size = 0x4000, scoped, tag = 'input window, operand 3, single buffered']
    #allocation8 [shape = 'u8[1024]{0}', space=vmem, size = 0x400, scoped, tag = 'output window, operand 0, single buffered']
    %10 = vsyncpa [#allocation3], 0
    %11 = vsyncpa [#allocation6], 0
    %12 = vsyncpa [#allocation4], 0
    // Predicated region
    $region2: #{tpu_custom_call.1} parent=1 // pred_check
      _
    $region3: #{tpu_custom_call.1} parent=1 // pred_check_branch
      %14 = sbr.rel (0) target = $region5
    $region4: #{tpu_custom_call.1} parent=1 // pred_region
      %s16 = ssub.s32 32, 32
      %17 = vsyncadd [#allocation3], %s16
      %s19 = sshll.u32 [#allocation2], 4
      %s20 = int_to_ptr.vmem [resolvable:$true] %s19
      %22 = dma.hbm_to_vmem [thread:$0]  %s0, 32, %s20, [#allocation3]
    $region5: #{tpu_custom_call.1} parent=1 // pred_fallthru
      _
    // Predicated region
    $region6: #{tpu_custom_call.1} parent=1 // pred_check
      _
    $region7: #{tpu_custom_call.1} parent=1 // pred_check_branch
      %24 = sbr.rel (0) target = $region9
    $region8: #{tpu_custom_call.1} parent=1 // pred_region
      %s26 = ssub.s32 512, 512
      %27 = vsyncadd [#allocation6], %s26
      %s28 = sshll.u32 [#allocation5], 4
      %s29 = int_to_ptr.vmem [resolvable:$true] %s28
      %34 = dma.hbm_to_vmem [thread:$0]  %s1, 512, %s29, [#allocation6], 128, 128, 8
    $region9: #{tpu_custom_call.1} parent=1 // pred_fallthru
      _
    // Predicated region
    $region10: #{tpu_custom_call.1} parent=1 // pred_check
      _
    $region11: #{tpu_custom_call.1} parent=1 // pred_check_branch
      %36 = sbr.rel (0) target = $region13
    $region12: #{tpu_custom_call.1} parent=1 // pred_region
      _
    $region13: #{tpu_custom_call.1} parent=1 // pred_fallthru
      _
    // Predicated region
    $region14: #{tpu_custom_call.1} parent=1 // pred_check
      _
    $region15: #{tpu_custom_call.1} parent=1 // pred_check_branch
      %38 = sbr.rel (0) target = $region17
    $region16: #{tpu_custom_call.1} parent=1 // pred_region
      %s40 = ssub.s32 512, 512
      %41 = vsyncadd [#allocation6], %s40
      %s42 = sshll.u32 [#allocation7], 4
      %s43 = int_to_ptr.vmem [resolvable:$true] %s42
      %48 = dma.hbm_to_vmem [thread:$0]  %s3, 512, %s43, [#allocation6], 128, 128, 8
    $region17: #{tpu_custom_call.1} parent=1 // pred_fallthru
      _
    // Predicated region
    $region18: #{tpu_custom_call.1} parent=1 // pred_check
      _
    $region19: #{tpu_custom_call.1} parent=1 // pred_check_branch
      %50 = sbr.rel (0) target = $region21
    $region20: #{tpu_custom_call.1} parent=1 // pred_region
      _
    $region21: #{tpu_custom_call.1} parent=1 // pred_fallthru
      _
    // Predicated region
    $region22: #{tpu_custom_call.1} parent=1 // pred_check
      _
    $region23: #{tpu_custom_call.1} parent=1 // pred_check_branch
      %52 = sbr.rel (0) target = $region25
    $region24: #{tpu_custom_call.1} parent=1 // pred_region
      %53 = dma.done [#allocation3], 32
    $region25: #{tpu_custom_call.1} parent=1 // pred_fallthru
      _
    // Predicated region
    $region26: #{tpu_custom_call.1} parent=1 // pred_check
      _
    $region27: #{tpu_custom_call.1} parent=1 // pred_check_branch
      %55 = sbr.rel (0) target = $region29
    $region28: #{tpu_custom_call.1} parent=1 // pred_region
      %56 = dma.done [#allocation6], 512
    $region29: #{tpu_custom_call.1} parent=1 // pred_fallthru
      _
    // Predicated region
    $region30: #{tpu_custom_call.1} parent=1 // pred_check
      _
    $region31: #{tpu_custom_call.1} parent=1 // pred_check_branch
      %58 = sbr.rel (0) target = $region33
    $region32: #{tpu_custom_call.1} parent=1 // pred_region
      %59 = dma.done [#allocation6], 512
    $region33: #{tpu_custom_call.1} parent=1 // pred_fallthru
      _
    %v60 = vld [vmem:[#allocation2] sm:$0x3]
    %v61 = vld [vmem:[#allocation5] sm:$0xff]
    %v62 = vld [vmem:[#allocation5 + $0x8] sm:$0xff]
    %v63 = vld [vmem:[#allocation5 + $0x10] sm:$0xff]
    %v64 = vld [vmem:[#allocation5 + $0x18] sm:$0xff]
    %v65 = vld [vmem:[%s2] sm:$0x1]
    %v67 = vlaneseq
    %v68 = vshrl.u32 %v67, 7
    %v69 = vsub.s32 0, %v68
    %v70 = vrot.slane %v65, %v69
    %vm72 = vcmask 261120
    %v74 = vsel %vm72, %v60, 0
    %76 = vmatprep.subr.mxu0 0.0
    %77 = vmatpush1.msra.mxu0 %v61
    %78 = vmatprep.subr.mxu0 0.0
    %79 = vmatpush1.msra.mxu0 %v62
    %80 = vmatprep.subr.mxu0 0.0
    %81 = vmatpush1.msra.mxu0 %v63
    %82 = vmatprep.subr.mxu0 0.0
    %83 = vmatpush1.msra.mxu0 %v64
    %84 = vmatprep.subr.mxu0 0.0
    %85 = vmatpush1.msra.mxu0 0.0
    %86 = vmatprep.subr.mxu0 0.0
    %87 = vmatpush1.msra.mxu0 0.0
    %88 = vmatprep.subr.mxu0 0.0
    %89 = vmatpush1.msra.mxu0 0.0
    %90 = vmatprep.subr.mxu0 0.0
    %91 = vmatpush1.msra.mxu0 0.0
    %92 = vmatprep.subr.mxu0 0.0
    %93 = vmatpush1.msra.mxu0 0.0
    %94 = vmatprep.subr.mxu0 0.0
    %95 = vmatpush1.msra.mxu0 0.0
    %96 = vmatprep.subr.mxu0 0.0
    %97 = vmatpush1.msra.mxu0 0.0
    %98 = vmatprep.subr.mxu0 0.0
    %99 = vmatpush1.msra.mxu0 0.0
    %100 = vmatprep.subr.mxu0 0.0
    %101 = vmatpush1.msra.mxu0 0.0
    %102 = vmatprep.subr.mxu0 0.0
    %103 = vmatpush1.msra.mxu0 0.0
    %104 = vmatprep.subr.mxu0 0.0
    %105 = vmatpush1.msra.mxu0 0.0
    %106 = vmatprep.subr.mxu0 0.0
    %107 = vmatpush1.msra.mxu0 0.0
    %108 = vmatprep.subr.mxu0 0.0
    %109 = vmatpush1.msra.mxu0 0.0
    %110 = vmatprep.subr.mxu0 0.0
    %111 = vmatpush1.msra.mxu0 0.0
    %112 = vmatprep.subr.mxu0 0.0
    %113 = vmatpush1.msra.mxu0 0.0
    %114 = vmatprep.subr.mxu0 0.0
    %115 = vmatpush1.msra.mxu0 0.0
    %116 = vmatprep.subr.mxu0 0.0
    %117 = vmatpush1.msra.mxu0 0.0
    %118 = vmatprep.subr.mxu0 0.0
    %119 = vmatpush1.msra.mxu0 0.0
    %120 = vmatprep.subr.mxu0 0.0
    %121 = vmatpush1.msra.mxu0 0.0
    %122 = vmatprep.subr.mxu0 0.0
    %123 = vmatpush1.msra.mxu0 0.0
    %124 = vmatprep.subr.mxu0 0.0
    %125 = vmatpush1.msra.mxu0 0.0
    %126 = vmatprep.subr.mxu0 0.0
    %127 = vmatpush1.msra.mxu0 0.0
    %128 = vmatprep.subr.mxu0 0.0
    %129 = vmatpush1.msra.mxu0 0.0
    %130 = vmatprep.subr.mxu0 0.0
    %131 = vmatpush1.msra.mxu0 0.0
    %132 = vmatprep.subr.mxu0 0.0
    %133 = vmatpush1.msra.mxu0 0.0
    %134 = vmatprep.subr.mxu0 0.0
    %135 = vmatpush1.msra.mxu0 0.0
    %136 = vmatprep.subr.mxu0 0.0
    %137 = vmatpush1.msra.mxu0 0.0
    %138 = vmatprep.subr.mxu0 0.0
    %139 = vmatpush1.msra.mxu0 0.0
    %140 = vmatprep.mubr.f32.mxu0 0.0
    %141 = vmatmul.mubr.f32.gmra.mrb[0].mxu0 %v74
    %v142 = vpop.f32.mrb[0].mxu0
    %v143 = vadd.f32 %v70, %v142
    %v144 = vpop.f32.mrb[0].mxu0
    %145 = vdwg.mxu0
    %v146 = vmul.f32 %v143, 0.70710677
    %v147 = verf.f32.pop %v146
    %v148 = vmul.f32 %v143, 0.5
    %v149 = vadd.f32 %v147, 1.0
    %v150 = vmul.f32 %v148, %v149
    %v151 = vld [vmem:[#allocation7] sm:$0xff]
    %v152 = vld [vmem:[#allocation7 + $0x8] sm:$0xff]
    %v153 = vld [vmem:[#allocation7 + $0x10] sm:$0xff]
    %v154 = vld [vmem:[#allocation7 + $0x18] sm:$0xff]
    %v155 = vld [vmem:[%s4] sm:$0x1]
    %v157 = vlaneseq
    %v158 = vshrl.u32 %v157, 7
    %v159 = vsub.s32 0, %v158
    %v160 = vrot.slane %v155, %v159
    %v163 = vsel %vm72, %v150, 0
    %165 = vmatprep.subr.mxu0 0.0
    %166 = vmatpush1.msra.mxu0 %v151
    %167 = vmatprep.subr.mxu0 0.0
    %168 = vmatpush1.msra.mxu0 %v152
    %169 = vmatprep.subr.mxu0 0.0
    %170 = vmatpush1.msra.mxu0 %v153
    %171 = vmatprep.subr.mxu0 0.0
    %172 = vmatpush1.msra.mxu0 %v154
    %173 = vmatprep.subr.mxu0 0.0
    %174 = vmatpush1.msra.mxu0 0.0
    %175 = vmatprep.subr.mxu0 0.0
    %176 = vmatpush1.msra.mxu0 0.0
    %177 = vmatprep.subr.mxu0 0.0
    %178 = vmatpush1.msra.mxu0 0.0
    %179 = vmatprep.subr.mxu0 0.0
    %180 = vmatpush1.msra.mxu0 0.0
    %181 = vmatprep.subr.mxu0 0.0
    %182 = vmatpush1.msra.mxu0 0.0
    %183 = vmatprep.subr.mxu0 0.0
    %184 = vmatpush1.msra.mxu0 0.0
    %185 = vmatprep.subr.mxu0 0.0
    %186 = vmatpush1.msra.mxu0 0.0
    %187 = vmatprep.subr.mxu0 0.0
    %188 = vmatpush1.msra.mxu0 0.0
    %189 = vmatprep.subr.mxu0 0.0
    %190 = vmatpush1.msra.mxu0 0.0
    %191 = vmatprep.subr.mxu0 0.0
    %192 = vmatpush1.msra.mxu0 0.0
    %193 = vmatprep.subr.mxu0 0.0
    %194 = vmatpush1.msra.mxu0 0.0
    %195 = vmatprep.subr.mxu0 0.0
    %196 = vmatpush1.msra.mxu0 0.0
    %197 = vmatprep.subr.mxu0 0.0
    %198 = vmatpush1.msra.mxu0 0.0
    %199 = vmatprep.subr.mxu0 0.0
    %200 = vmatpush1.msra.mxu0 0.0
    %201 = vmatprep.subr.mxu0 0.0
    %202 = vmatpush1.msra.mxu0 0.0
    %203 = vmatprep.subr.mxu0 0.0
    %204 = vmatpush1.msra.mxu0 0.0
    %205 = vmatprep.subr.mxu0 0.0
    %206 = vmatpush1.msra.mxu0 0.0
    %207 = vmatprep.subr.mxu0 0.0
    %208 = vmatpush1.msra.mxu0 0.0
    %209 = vmatprep.subr.mxu0 0.0
    %210 = vmatpush1.msra.mxu0 0.0
    %211 = vmatprep.subr.mxu0 0.0
    %212 = vmatpush1.msra.mxu0 0.0
    %213 = vmatprep.subr.mxu0 0.0
    %214 = vmatpush1.msra.mxu0 0.0
    %215 = vmatprep.subr.mxu0 0.0
    %216 = vmatpush1.msra.mxu0 0.0
    %217 = vmatprep.subr.mxu0 0.0
    %218 = vmatpush1.msra.mxu0 0.0
    %219 = vmatprep.subr.mxu0 0.0
    %220 = vmatpush1.msra.mxu0 0.0
    %221 = vmatprep.subr.mxu0 0.0
    %222 = vmatpush1.msra.mxu0 0.0
    %223 = vmatprep.subr.mxu0 0.0
    %224 = vmatpush1.msra.mxu0 0.0
    %225 = vmatprep.subr.mxu0 0.0
    %226 = vmatpush1.msra.mxu0 0.0
    %227 = vmatprep.subr.mxu0 0.0
    %228 = vmatpush1.msra.mxu0 0.0
    %229 = vmatprep.mubr.f32.mxu0 0.0
    %230 = vmatmul.mubr.f32.gmra.mrb[0].mxu0 %v163
    %v231 = vpop.f32.mrb[0].mxu0
    %v232 = vadd.f32 %v160, %v231
    %v233 = vpop.f32.mrb[0].mxu0
    %234 = vdwg.mxu0
    %235 = vst [vmem:[#allocation8] sm:$0x3] %v232
    // Predicated region
    $region34: #{tpu_custom_call.1} parent=1 // pred_check
      _
    $region35: #{tpu_custom_call.1} parent=1 // pred_check_branch
      %237 = sbr.rel (0) target = $region37
    $region36: #{tpu_custom_call.1} parent=1 // pred_region
      %s239 = ssub.s32 32, 32
      %240 = vsyncadd [#allocation4], %s239
      %s242 = sshll.u32 [#allocation8], 4
      %s243 = int_to_ptr.vmem [resolvable:$true] %s242
      %245 = dma.vmem_to_hbm [thread:$0]  %s243, 32, %s5, [#allocation4]
    $region37: #{tpu_custom_call.1} parent=1 // pred_fallthru
      _
    // Predicated region
    $region38: #{tpu_custom_call.1} parent=1 // pred_check
      _
    $region39: #{tpu_custom_call.1} parent=1 // pred_check_branch
      %247 = sbr.rel (0) target = $region41
    $region40: #{tpu_custom_call.1} parent=1 // pred_region
      %248 = dma.done [#allocation4], 32
    $region41: #{tpu_custom_call.1} parent=1 // pred_fallthru
      _
    %249 = vsyncpa [#allocation3], 1
    %250 = vsyncpa [#allocation6], 1
    %251 = vsyncpa [#allocation4], 1

</llo_original>
